<compile_context>
chip_gen: v7x
topology: tpu7x:2x2x1
jax: 0.10.0
libtpu: 0.0.40
codegen_flags: <defaults>
</compile_context>

<pallas_src>
import math

import jax
import jax.numpy as jnp
from jax.experimental import pallas as pl
from jax.experimental.pallas import tpu as pltpu

KH = KW = 4      # ConvTranspose2d kernel size
STRIDE = 2
CT_PAD = 1 + 2   # padding arg of the ConvTranspose2d


def _round_up(x, m):
    return ((x + m - 1) // m) * m


# ---------------------------------------------------------------------------
# Pallas kernel: fused-phase VPU broadcast-FMAs over lane-aligned windows.
# ---------------------------------------------------------------------------
def _make_head_kernel(NW, R, L_tile):
    """Build the kernel for static (NW = 9*C window rows, R = 4*CO out rows).

    Refs (per grid step (n, t)):
      w_ref : (R, NW)      VMEM; fused weight table (zero where a window does
                           not feed a phase)
      b_ref : (R, 1)       VMEM; bias replicated over the 4 phases
      x_ref : (NW, L_tile) VMEM; pre-shifted, lane-aligned window rows
      o_ref : (R, L_tile)  VMEM; row (ph*2+pw)*CO+co, flat index m*W+j holds
                           out[co, 2m+ph, 2j+pw]
    """
    def kernel(w_ref, b_ref, x_ref, o_ref):
        w = w_ref[...]                                   # weight read hoisted (once)
        # Bias as accumulator init: saves the per-phase bias-add passes.
        acc = jnp.broadcast_to(b_ref[...], (R, L_tile))
        for r in range(NW):                              # 9*C = 36 windows
            # (R,1) * (1,L) broadcast-FMA on the VPU; the window load is a
            # contiguous, 128-lane-aligned row slice (no XLU rotations).
            acc = acc + w[:, r:r + 1] * x_ref[r:r + 1, :]
        o_ref[...] = acc                                 # ONE aligned, unmasked store
    return kernel


# ---------------------------------------------------------------------------
# Glue (plain JAX): padding, window pre-shift, weight table, de-interleave.
# ---------------------------------------------------------------------------
def init_head_params(key, in_ch, out_ch):
    """Deterministic stand-in for EqualLR(ConvTranspose2d) params.

    PyTorch ConvTranspose2d weight layout: (in_ch, out_ch, kH, kW).
    EqualLR init: weight ~ N(0, 1); bias given a small value so it is
    exercised."""
    params = {}
    for name, ch in out_ch.items():
        key, kw_, kb_ = jax.random.split(key, 3)
        w = jax.random.normal(kw_, (in_ch, ch, KH, KW), jnp.float32)
        b = 0.1 * jax.random.normal(kb_, (ch,), jnp.float32)
        params[name] = (w, b)
    return params


def _pad_ring_reflect(x_nchw):
    """ops.Pad(padding=1, horizontal='circular', vertical='reflect').

    Assumption (matching the usual F.pad-per-direction implementation):
    width padded circularly first, then height reflect-padded (PyTorch
    'reflect' == jnp 'reflect', edge not repeated)."""
    x = jnp.pad(x_nchw, ((0, 0), (0, 0), (0, 0), (1, 1)), mode="wrap")
    x = jnp.pad(x, ((0, 0), (0, 0), (1, 1), (0, 0)), mode="reflect")
    return x


def _build_tables(params, C):
    """Fused weight table (4*CO, 9*C) and bias column (4*CO, 1).

    Row r = (ph*2+pw)*CO + co; column q = (a*3+c)*C + ci holds
    w_scaled[ci, co, 3-(2*(a-ph)+ph), 3-(2*(c-pw)+pw)] when (a-ph),(c-pw) in
    {0,1}, else 0 (that window does not feed that phase)."""
    names = list(params.keys())
    cos = [int(params[nm][0].shape[1]) for nm in names]
    CO = sum(cos)

    w_list, b_list = [], []
    for nm in names:
        w_pt, bias = params[nm]
        co = w_pt.shape[1]
        # EqualLR scale (rosinality convention): fan_in = weight.size(1)*kH*kW,
        # i.e. out_ch*kH*kW for a ConvTranspose2d weight (in_ch, out_ch, kH, kW).
        scale = math.sqrt(2.0 / (co * KH * KW))
        w_list.append(w_pt * scale)
        b_list.append(bias)
    w_all = jnp.concatenate(w_list, axis=1)          # (C, CO, 4, 4)
    b_all = jnp.concatenate(b_list, axis=0)          # (CO,)

    R, NW = 4 * CO, 9 * C
    w_tab = jnp.zeros((R, NW), jnp.float32)
    for ph in range(2):
        for pw in range(2):
            for da in range(2):
                for dc in range(2):
                    a, c = ph + da, pw + dc
                    blk = w_all[:, :, 3 - (2 * da + ph), 3 - (2 * dc + pw)]  # (C, CO)
                    r0 = (ph * 2 + pw) * CO
                    c0 = (a * 3 + c) * C
                    w_tab = w_tab.at[r0:r0 + CO, c0:c0 + C].set(blk.T)
    b_col = jnp.tile(b_all, 4).reshape(R, 1)         # same bias for all 4 phases
    return names, cos, CO, w_tab, b_col


def head_forward(x_nchw, params):
    N, C, H, W = x_nchw.shape
    xp = _pad_ring_reflect(x_nchw)                   # (N, C, H+2, W+2)

    names, cos, CO, w_tab, b_col = _build_tables(params, C)
    R, NW = 4 * CO, 9 * C

    # Pre-shift the 9 distinct windows into lane-aligned rows (width de-padded
    # to W): x_win[n, (a*3+c)*C+ci, m*W+j] = xp[n, ci, m+a, j+c].
    wins = []
    for a in range(3):
        for c in range(3):
            wins.append(xp[:, :, a:a + H, c:c + W].reshape(N, C, H * W))
    x_win = jnp.concatenate(wins, axis=1)            # (N, 9*C, H*W)

    L0 = _round_up(H * W, 128)
    L_tile = 128 if L0 <= 512 else 512               # lane tile (multiple of 128)
    L_pad = _round_up(H * W, L_tile)
    n_tiles = L_pad // L_tile
    x_win = jnp.pad(x_win, ((0, 0), (0, 0), (0, L_pad - H * W)))

    OH, OW = 2 * H, 2 * W
    kernel = _make_head_kernel(NW, R, L_tile)

    out_flat = pl.pallas_call(
        kernel,
        out_shape=jax.ShapeDtypeStruct((N, R, L_pad), jnp.float32),
        grid=(N, n_tiles),
        in_specs=[
            pl.BlockSpec((R, NW), lambda n, t: (0, 0)),              # weights (resident)
            pl.BlockSpec((R, 1), lambda n, t: (0, 0)),               # bias (resident)
            pl.BlockSpec((None, NW, L_tile), lambda n, t: (n, 0, t)),  # windows
        ],
        out_specs=pl.BlockSpec((None, R, L_tile), lambda n, t: (n, 0, t)),
        compiler_params=pltpu.CompilerParams(
            dimension_semantics=("parallel", "parallel"),
            vmem_limit_bytes=32 * 1024 * 1024,
        ),
        cost_estimate=pl.CostEstimate(
            flops=2 * N * R * NW * L_pad,
            transcendentals=0,
            bytes_accessed=4 * (N * NW * L_pad + N * R * L_pad + R * NW + R),
        ),
    )(w_tab, b_col, x_win)

    # Decode: row (ph*2+pw)*CO+co, flat p=m*W+j  ->  out[n, co, 2m+ph, 2j+pw].
    y = out_flat[:, :, :H * W].reshape(N, 2, 2, CO, H, W)
    y = jnp.transpose(y, (0, 3, 4, 1, 5, 2)).reshape(N, CO, OH, OW)

    out, off = {}, 0
    for nm, co in zip(names, cos):
        out[nm] = y[:, off:off + co]
        off += co
    return out


# ---------------------------------------------------------------------------
# Independent reference: direct scatter-form ConvTranspose2d (PyTorch
# semantics), NOT the gather/flip/phase decomposition used by the kernel.
# ---------------------------------------------------------------------------
def _conv_transpose2d_nchw(x, w, b, stride, padding):
    """x: (N, Cin, H, W); w: (Cin, Cout, kH, kW) [PyTorch layout]; b: (Cout,)."""
    N, Cin, H, W = x.shape
    _, Cout, kH, kW = w.shape
    Hf = (H - 1) * stride + kH
    Wf = (W - 1) * stride + kW
    out = jnp.zeros((N, Cout, Hf, Wf), jnp.float32)
    for kh in range(kH):
        for kw in range(kW):
            contrib = jnp.einsum("ncij,cd->ndij", x, w[:, :, kh, kw])
            out = out.at[:, :, kh:kh + stride * H:stride,
                         kw:kw + stride * W:stride].add(contrib)
    out = out[:, :, padding:Hf - padding, padding:Wf - padding]
    return out + b[None, :, None, None]


def _head_forward_ref(x_nchw, params):
    xp = _pad_ring_reflect(x_nchw)
    out = {}
    for nm, (w_pt, bias) in params.items():
        co = w_pt.shape[1]
        scale = math.sqrt(2.0 / (co * KH * KW))
        out[nm] = _conv_transpose2d_nchw(xp, w_pt * scale, bias, STRIDE, CT_PAD)
    return out


if __name__ == "__main__":
    key = jax.random.PRNGKey(0)
    k_x, k_p = jax.random.split(key)

    N, IN_CH, H, W = 2, 4, 16, 16
    OUT_CH = {"rgb": 3, "alpha": 1}

    x = jax.random.normal(k_x, (N, IN_CH, H, W), jnp.float32)
    params = init_head_params(k_p, IN_CH, OUT_CH)

    fwd = jax.jit(head_forward)
    out = fwd(x, params)
    out = jax.tree_util.tree_map(jax.block_until_ready, out)

    ref = _head_forward_ref(x, params)
    for name, co in OUT_CH.items():
        assert out[name].shape == (N, co, 2 * H, 2 * W), out[name].shape
        assert jnp.allclose(out[name], ref[name], atol=1e-4, rtol=1e-4), name

    print("KERNEL_OK")
</pallas_src>

<mosaic_0001>
module attributes {stable_mosaic.version = 11 : i64} {
  func.func @kernel(%arg0: i32, %arg1: i32, %arg2: memref<16x36xf32, #tpu.memory_space<vmem>>, %arg3: memref<16x1xf32, #tpu.memory_space<vmem>>, %arg4: memref<1x36x128xf32, #tpu.memory_space<vmem>>, %arg5: memref<1x16x128xf32, #tpu.memory_space<vmem>>) attributes {dimension_semantics = [#tpu.dimension_semantics<parallel>, #tpu.dimension_semantics<parallel>], iteration_bounds = array<i64: 2, 2>, scalar_prefetch = 0 : i64, scratch_operands = 0 : i64, tpu.core_type = #tpu.core_type<tc>, window_params = [{pipeline_mode = #tpu.pipeline_mode<synchronous>, transform_indices = @transform_0, window_bounds = array<i64: 16, 36>}, {pipeline_mode = #tpu.pipeline_mode<synchronous>, transform_indices = @transform_1, window_bounds = array<i64: 16, 1>}, {transform_indices = @transform_2, window_bounds = array<i64: 1, 36, 128>}, {transform_indices = @transform_3, window_bounds = array<i64: 1, 16, 128>}]} {
    %c0 = arith.constant 0 : index
    %c0_0 = arith.constant 0 : index
    %0 = vector.load %arg2[%c0, %c0_0] : memref<16x36xf32, #tpu.memory_space<vmem>>, vector<16x36xf32>
    %c0_1 = arith.constant 0 : index
    %c0_2 = arith.constant 0 : index
    %1 = vector.load %arg3[%c0_1, %c0_2] : memref<16x1xf32, #tpu.memory_space<vmem>>, vector<16x1xf32>
    %2 = vector.shape_cast %1 : vector<16x1xf32> to vector<16x1xf32>
    %3 = vector.broadcast %2 : vector<16x1xf32> to vector<16x128xf32>
    %4 = vector.extract_strided_slice %0 {offsets = [0, 0], sizes = [16, 1], strides = [1, 1]} : vector<16x36xf32> to vector<16x1xf32>
    %c0_3 = arith.constant 0 : index
    %c0_4 = arith.constant 0 : index
    %c0_5 = arith.constant 0 : index
    %5 = vector.load %arg4[%c0_3, %c0_4, %c0_5] : memref<1x36x128xf32, #tpu.memory_space<vmem>>, vector<1x1x128xf32>
    %6 = vector.shape_cast %5 : vector<1x1x128xf32> to vector<1x128xf32>
    %7 = vector.broadcast %4 : vector<16x1xf32> to vector<16x128xf32>
    %8 = vector.broadcast %6 : vector<1x128xf32> to vector<16x128xf32>
    %9 = arith.mulf %7, %8 : vector<16x128xf32>
    %10 = arith.addf %3, %9 : vector<16x128xf32>
    %11 = vector.extract_strided_slice %0 {offsets = [0, 1], sizes = [16, 1], strides = [1, 1]} : vector<16x36xf32> to vector<16x1xf32>
    %c0_6 = arith.constant 0 : index
    %c1 = arith.constant 1 : index
    %c0_7 = arith.constant 0 : index
    %12 = vector.load %arg4[%c0_6, %c1, %c0_7] : memref<1x36x128xf32, #tpu.memory_space<vmem>>, vector<1x1x128xf32>
    %13 = vector.shape_cast %12 : vector<1x1x128xf32> to vector<1x128xf32>
    %14 = vector.broadcast %11 : vector<16x1xf32> to vector<16x128xf32>
    %15 = vector.broadcast %13 : vector<1x128xf32> to vector<16x128xf32>
    %16 = arith.mulf %14, %15 : vector<16x128xf32>
    %17 = arith.addf %10, %16 : vector<16x128xf32>
    %18 = vector.extract_strided_slice %0 {offsets = [0, 2], sizes = [16, 1], strides = [1, 1]} : vector<16x36xf32> to vector<16x1xf32>
    %c0_8 = arith.constant 0 : index
    %c2 = arith.constant 2 : index
    %c0_9 = arith.constant 0 : index
    %19 = vector.load %arg4[%c0_8, %c2, %c0_9] : memref<1x36x128xf32, #tpu.memory_space<vmem>>, vector<1x1x128xf32>
    %20 = vector.shape_cast %19 : vector<1x1x128xf32> to vector<1x128xf32>
    %21 = vector.broadcast %18 : vector<16x1xf32> to vector<16x128xf32>
    %22 = vector.broadcast %20 : vector<1x128xf32> to vector<16x128xf32>
    %23 = arith.mulf %21, %22 : vector<16x128xf32>
    %24 = arith.addf %17, %23 : vector<16x128xf32>
    %25 = vector.extract_strided_slice %0 {offsets = [0, 3], sizes = [16, 1], strides = [1, 1]} : vector<16x36xf32> to vector<16x1xf32>
    %c0_10 = arith.constant 0 : index
    %c3 = arith.constant 3 : index
    %c0_11 = arith.constant 0 : index
    %26 = vector.load %arg4[%c0_10, %c3, %c0_11] : memref<1x36x128xf32, #tpu.memory_space<vmem>>, vector<1x1x128xf32>
    %27 = vector.shape_cast %26 : vector<1x1x128xf32> to vector<1x128xf32>
    %28 = vector.broadcast %25 : vector<16x1xf32> to vector<16x128xf32>
    %29 = vector.broadcast %27 : vector<1x128xf32> to vector<16x128xf32>
    %30 = arith.mulf %28, %29 : vector<16x128xf32>
    %31 = arith.addf %24, %30 : vector<16x128xf32>
    %32 = vector.extract_strided_slice %0 {offsets = [0, 4], sizes = [16, 1], strides = [1, 1]} : vector<16x36xf32> to vector<16x1xf32>
    %c0_12 = arith.constant 0 : index
    %c4 = arith.constant 4 : index
    %c0_13 = arith.constant 0 : index
    %33 = vector.load %arg4[%c0_12, %c4, %c0_13] : memref<1x36x128xf32, #tpu.memory_space<vmem>>, vector<1x1x128xf32>
    %34 = vector.shape_cast %33 : vector<1x1x128xf32> to vector<1x128xf32>
    %35 = vector.broadcast %32 : vector<16x1xf32> to vector<16x128xf32>
    %36 = vector.broadcast %34 : vector<1x128xf32> to vector<16x128xf32>
    %37 = arith.mulf %35, %36 : vector<16x128xf32>
    %38 = arith.addf %31, %37 : vector<16x128xf32>
    %39 = vector.extract_strided_slice %0 {offsets = [0, 5], sizes = [16, 1], strides = [1, 1]} : vector<16x36xf32> to vector<16x1xf32>
    %c0_14 = arith.constant 0 : index
    %c5 = arith.constant 5 : index
    %c0_15 = arith.constant 0 : index
    %40 = vector.load %arg4[%c0_14, %c5, %c0_15] : memref<1x36x128xf32, #tpu.memory_space<vmem>>, vector<1x1x128xf32>
    %41 = vector.shape_cast %40 : vector<1x1x128xf32> to vector<1x128xf32>
    %42 = vector.broadcast %39 : vector<16x1xf32> to vector<16x128xf32>
    %43 = vector.broadcast %41 : vector<1x128xf32> to vector<16x128xf32>
    %44 = arith.mulf %42, %43 : vector<16x128xf32>
    %45 = arith.addf %38, %44 : vector<16x128xf32>
    %46 = vector.extract_strided_slice %0 {offsets = [0, 6], sizes = [16, 1], strides = [1, 1]} : vector<16x36xf32> to vector<16x1xf32>
    %c0_16 = arith.constant 0 : index
    %c6 = arith.constant 6 : index
    %c0_17 = arith.constant 0 : index
    %47 = vector.load %arg4[%c0_16, %c6, %c0_17] : memref<1x36x128xf32, #tpu.memory_space<vmem>>, vector<1x1x128xf32>
    %48 = vector.shape_cast %47 : vector<1x1x128xf32> to vector<1x128xf32>
    %49 = vector.broadcast %46 : vector<16x1xf32> to vector<16x128xf32>
    %50 = vector.broadcast %48 : vector<1x128xf32> to vector<16x128xf32>
    %51 = arith.mulf %49, %50 : vector<16x128xf32>
    %52 = arith.addf %45, %51 : vector<16x128xf32>
    %53 = vector.extract_strided_slice %0 {offsets = [0, 7], sizes = [16, 1], strides = [1, 1]} : vector<16x36xf32> to vector<16x1xf32>
    %c0_18 = arith.constant 0 : index
    %c7 = arith.constant 7 : index
    %c0_19 = arith.constant 0 : index
    %54 = vector.load %arg4[%c0_18, %c7, %c0_19] : memref<1x36x128xf32, #tpu.memory_space<vmem>>, vector<1x1x128xf32>
    %55 = vector.shape_cast %54 : vector<1x1x128xf32> to vector<1x128xf32>
    %56 = vector.broadcast %53 : vector<16x1xf32> to vector<16x128xf32>
    %57 = vector.broadcast %55 : vector<1x128xf32> to vector<16x128xf32>
    %58 = arith.mulf %56, %57 : vector<16x128xf32>
    %59 = arith.addf %52, %58 : vector<16x128xf32>
    %60 = vector.extract_strided_slice %0 {offsets = [0, 8], sizes = [16, 1], strides = [1, 1]} : vector<16x36xf32> to vector<16x1xf32>
    %c0_20 = arith.constant 0 : index
    %c8 = arith.constant 8 : index
    %c0_21 = arith.constant 0 : index
    %61 = vector.load %arg4[%c0_20, %c8, %c0_21] : memref<1x36x128xf32, #tpu.memory_space<vmem>>, vector<1x1x128xf32>
    %62 = vector.shape_cast %61 : vector<1x1x128xf32> to vector<1x128xf32>
    %63 = vector.broadcast %60 : vector<16x1xf32> to vector<16x128xf32>
    %64 = vector.broadcast %62 : vector<1x128xf32> to vector<16x128xf32>
    %65 = arith.mulf %63, %64 : vector<16x128xf32>
    %66 = arith.addf %59, %65 : vector<16x128xf32>
    %67 = vector.extract_strided_slice %0 {offsets = [0, 9], sizes = [16, 1], strides = [1, 1]} : vector<16x36xf32> to vector<16x1xf32>
    %c0_22 = arith.constant 0 : index
    %c9 = arith.constant 9 : index
    %c0_23 = arith.constant 0 : index
    %68 = vector.load %arg4[%c0_22, %c9, %c0_23] : memref<1x36x128xf32, #tpu.memory_space<vmem>>, vector<1x1x128xf32>
    %69 = vector.shape_cast %68 : vector<1x1x128xf32> to vector<1x128xf32>
    %70 = vector.broadcast %67 : vector<16x1xf32> to vector<16x128xf32>
    %71 = vector.broadcast %69 : vector<1x128xf32> to vector<16x128xf32>
    %72 = arith.mulf %70, %71 : vector<16x128xf32>
    %73 = arith.addf %66, %72 : vector<16x128xf32>
    %74 = vector.extract_strided_slice %0 {offsets = [0, 10], sizes = [16, 1], strides = [1, 1]} : vector<16x36xf32> to vector<16x1xf32>
    %c0_24 = arith.constant 0 : index
    %c10 = arith.constant 10 : index
    %c0_25 = arith.constant 0 : index
    %75 = vector.load %arg4[%c0_24, %c10, %c0_25] : memref<1x36x128xf32, #tpu.memory_space<vmem>>, vector<1x1x128xf32>
    %76 = vector.shape_cast %75 : vector<1x1x128xf32> to vector<1x128xf32>
    %77 = vector.broadcast %74 : vector<16x1xf32> to vector<16x128xf32>
    %78 = vector.broadcast %76 : vector<1x128xf32> to vector<16x128xf32>
    %79 = arith.mulf %77, %78 : vector<16x128xf32>
    %80 = arith.addf %73, %79 : vector<16x128xf32>
    %81 = vector.extract_strided_slice %0 {offsets = [0, 11], sizes = [16, 1], strides = [1, 1]} : vector<16x36xf32> to vector<16x1xf32>
    %c0_26 = arith.constant 0 : index
    %c11 = arith.constant 11 : index
    %c0_27 = arith.constant 0 : index
    %82 = vector.load %arg4[%c0_26, %c11, %c0_27] : memref<1x36x128xf32, #tpu.memory_space<vmem>>, vector<1x1x128xf32>
    %83 = vector.shape_cast %82 : vector<1x1x128xf32> to vector<1x128xf32>
    %84 = vector.broadcast %81 : vector<16x1xf32> to vector<16x128xf32>
    %85 = vector.broadcast %83 : vector<1x128xf32> to vector<16x128xf32>
    %86 = arith.mulf %84, %85 : vector<16x128xf32>
    %87 = arith.addf %80, %86 : vector<16x128xf32>
    %88 = vector.extract_strided_slice %0 {offsets = [0, 12], sizes = [16, 1], strides = [1, 1]} : vector<16x36xf32> to vector<16x1xf32>
    %c0_28 = arith.constant 0 : index
    %c12 = arith.constant 12 : index
    %c0_29 = arith.constant 0 : index
    %89 = vector.load %arg4[%c0_28, %c12, %c0_29] : memref<1x36x128xf32, #tpu.memory_space<vmem>>, vector<1x1x128xf32>
    %90 = vector.shape_cast %89 : vector<1x1x128xf32> to vector<1x128xf32>
    %91 = vector.broadcast %88 : vector<16x1xf32> to vector<16x128xf32>
    %92 = vector.broadcast %90 : vector<1x128xf32> to vector<16x128xf32>
    %93 = arith.mulf %91, %92 : vector<16x128xf32>
    %94 = arith.addf %87, %93 : vector<16x128xf32>
    %95 = vector.extract_strided_slice %0 {offsets = [0, 13], sizes = [16, 1], strides = [1, 1]} : vector<16x36xf32> to vector<16x1xf32>
    %c0_30 = arith.constant 0 : index
    %c13 = arith.constant 13 : index
    %c0_31 = arith.constant 0 : index
    %96 = vector.load %arg4[%c0_30, %c13, %c0_31] : memref<1x36x128xf32, #tpu.memory_space<vmem>>, vector<1x1x128xf32>
    %97 = vector.shape_cast %96 : vector<1x1x128xf32> to vector<1x128xf32>
    %98 = vector.broadcast %95 : vector<16x1xf32> to vector<16x128xf32>
    %99 = vector.broadcast %97 : vector<1x128xf32> to vector<16x128xf32>
    %100 = arith.mulf %98, %99 : vector<16x128xf32>
    %101 = arith.addf %94, %100 : vector<16x128xf32>
    %102 = vector.extract_strided_slice %0 {offsets = [0, 14], sizes = [16, 1], strides = [1, 1]} : vector<16x36xf32> to vector<16x1xf32>
    %c0_32 = arith.constant 0 : index
    %c14 = arith.constant 14 : index
    %c0_33 = arith.constant 0 : index
    %103 = vector.load %arg4[%c0_32, %c14, %c0_33] : memref<1x36x128xf32, #tpu.memory_space<vmem>>, vector<1x1x128xf32>
    %104 = vector.shape_cast %103 : vector<1x1x128xf32> to vector<1x128xf32>
    %105 = vector.broadcast %102 : vector<16x1xf32> to vector<16x128xf32>
    %106 = vector.broadcast %104 : vector<1x128xf32> to vector<16x128xf32>
    %107 = arith.mulf %105, %106 : vector<16x128xf32>
    %108 = arith.addf %101, %107 : vector<16x128xf32>
    %109 = vector.extract_strided_slice %0 {offsets = [0, 15], sizes = [16, 1], strides = [1, 1]} : vector<16x36xf32> to vector<16x1xf32>
    %c0_34 = arith.constant 0 : index
    %c15 = arith.constant 15 : index
    %c0_35 = arith.constant 0 : index
    %110 = vector.load %arg4[%c0_34, %c15, %c0_35] : memref<1x36x128xf32, #tpu.memory_space<vmem>>, vector<1x1x128xf32>
    %111 = vector.shape_cast %110 : vector<1x1x128xf32> to vector<1x128xf32>
    %112 = vector.broadcast %109 : vector<16x1xf32> to vector<16x128xf32>
    %113 = vector.broadcast %111 : vector<1x128xf32> to vector<16x128xf32>
    %114 = arith.mulf %112, %113 : vector<16x128xf32>
    %115 = arith.addf %108, %114 : vector<16x128xf32>
    %116 = vector.extract_strided_slice %0 {offsets = [0, 16], sizes = [16, 1], strides = [1, 1]} : vector<16x36xf32> to vector<16x1xf32>
    %c0_36 = arith.constant 0 : index
    %c16 = arith.constant 16 : index
    %c0_37 = arith.constant 0 : index
    %117 = vector.load %arg4[%c0_36, %c16, %c0_37] : memref<1x36x128xf32, #tpu.memory_space<vmem>>, vector<1x1x128xf32>
    %118 = vector.shape_cast %117 : vector<1x1x128xf32> to vector<1x128xf32>
    %119 = vector.broadcast %116 : vector<16x1xf32> to vector<16x128xf32>
    %120 = vector.broadcast %118 : vector<1x128xf32> to vector<16x128xf32>
    %121 = arith.mulf %119, %120 : vector<16x128xf32>
    %122 = arith.addf %115, %121 : vector<16x128xf32>
    %123 = vector.extract_strided_slice %0 {offsets = [0, 17], sizes = [16, 1], strides = [1, 1]} : vector<16x36xf32> to vector<16x1xf32>
    %c0_38 = arith.constant 0 : index
    %c17 = arith.constant 17 : index
    %c0_39 = arith.constant 0 : index
    %124 = vector.load %arg4[%c0_38, %c17, %c0_39] : memref<1x36x128xf32, #tpu.memory_space<vmem>>, vector<1x1x128xf32>
    %125 = vector.shape_cast %124 : vector<1x1x128xf32> to vector<1x128xf32>
    %126 = vector.broadcast %123 : vector<16x1xf32> to vector<16x128xf32>
    %127 = vector.broadcast %125 : vector<1x128xf32> to vector<16x128xf32>
    %128 = arith.mulf %126, %127 : vector<16x128xf32>
    %129 = arith.addf %122, %128 : vector<16x128xf32>
    %130 = vector.extract_strided_slice %0 {offsets = [0, 18], sizes = [16, 1], strides = [1, 1]} : vector<16x36xf32> to vector<16x1xf32>
    %c0_40 = arith.constant 0 : index
    %c18 = arith.constant 18 : index
    %c0_41 = arith.constant 0 : index
    %131 = vector.load %arg4[%c0_40, %c18, %c0_41] : memref<1x36x128xf32, #tpu.memory_space<vmem>>, vector<1x1x128xf32>
    %132 = vector.shape_cast %131 : vector<1x1x128xf32> to vector<1x128xf32>
    %133 = vector.broadcast %130 : vector<16x1xf32> to vector<16x128xf32>
    %134 = vector.broadcast %132 : vector<1x128xf32> to vector<16x128xf32>
    %135 = arith.mulf %133, %134 : vector<16x128xf32>
    %136 = arith.addf %129, %135 : vector<16x128xf32>
    %137 = vector.extract_strided_slice %0 {offsets = [0, 19], sizes = [16, 1], strides = [1, 1]} : vector<16x36xf32> to vector<16x1xf32>
    %c0_42 = arith.constant 0 : index
    %c19 = arith.constant 19 : index
    %c0_43 = arith.constant 0 : index
    %138 = vector.load %arg4[%c0_42, %c19, %c0_43] : memref<1x36x128xf32, #tpu.memory_space<vmem>>, vector<1x1x128xf32>
    %139 = vector.shape_cast %138 : vector<1x1x128xf32> to vector<1x128xf32>
    %140 = vector.broadcast %137 : vector<16x1xf32> to vector<16x128xf32>
    %141 = vector.broadcast %139 : vector<1x128xf32> to vector<16x128xf32>
    %142 = arith.mulf %140, %141 : vector<16x128xf32>
    %143 = arith.addf %136, %142 : vector<16x128xf32>
    %144 = vector.extract_strided_slice %0 {offsets = [0, 20], sizes = [16, 1], strides = [1, 1]} : vector<16x36xf32> to vector<16x1xf32>
    %c0_44 = arith.constant 0 : index
    %c20 = arith.constant 20 : index
    %c0_45 = arith.constant 0 : index
    %145 = vector.load %arg4[%c0_44, %c20, %c0_45] : memref<1x36x128xf32, #tpu.memory_space<vmem>>, vector<1x1x128xf32>
    %146 = vector.shape_cast %145 : vector<1x1x128xf32> to vector<1x128xf32>
    %147 = vector.broadcast %144 : vector<16x1xf32> to vector<16x128xf32>
    %148 = vector.broadcast %146 : vector<1x128xf32> to vector<16x128xf32>
    %149 = arith.mulf %147, %148 : vector<16x128xf32>
    %150 = arith.addf %143, %149 : vector<16x128xf32>
    %151 = vector.extract_strided_slice %0 {offsets = [0, 21], sizes = [16, 1], strides = [1, 1]} : vector<16x36xf32> to vector<16x1xf32>
    %c0_46 = arith.constant 0 : index
    %c21 = arith.constant 21 : index
    %c0_47 = arith.constant 0 : index
    %152 = vector.load %arg4[%c0_46, %c21, %c0_47] : memref<1x36x128xf32, #tpu.memory_space<vmem>>, vector<1x1x128xf32>
    %153 = vector.shape_cast %152 : vector<1x1x128xf32> to vector<1x128xf32>
    %154 = vector.broadcast %151 : vector<16x1xf32> to vector<16x128xf32>
    %155 = vector.broadcast %153 : vector<1x128xf32> to vector<16x128xf32>
    %156 = arith.mulf %154, %155 : vector<16x128xf32>
    %157 = arith.addf %150, %156 : vector<16x128xf32>
    %158 = vector.extract_strided_slice %0 {offsets = [0, 22], sizes = [16, 1], strides = [1, 1]} : vector<16x36xf32> to vector<16x1xf32>
    %c0_48 = arith.constant 0 : index
    %c22 = arith.constant 22 : index
    %c0_49 = arith.constant 0 : index
    %159 = vector.load %arg4[%c0_48, %c22, %c0_49] : memref<1x36x128xf32, #tpu.memory_space<vmem>>, vector<1x1x128xf32>
    %160 = vector.shape_cast %159 : vector<1x1x128xf32> to vector<1x128xf32>
    %161 = vector.broadcast %158 : vector<16x1xf32> to vector<16x128xf32>
    %162 = vector.broadcast %160 : vector<1x128xf32> to vector<16x128xf32>
    %163 = arith.mulf %161, %162 : vector<16x128xf32>
    %164 = arith.addf %157, %163 : vector<16x128xf32>
    %165 = vector.extract_strided_slice %0 {offsets = [0, 23], sizes = [16, 1], strides = [1, 1]} : vector<16x36xf32> to vector<16x1xf32>
    %c0_50 = arith.constant 0 : index
    %c23 = arith.constant 23 : index
    %c0_51 = arith.constant 0 : index
    %166 = vector.load %arg4[%c0_50, %c23, %c0_51] : memref<1x36x128xf32, #tpu.memory_space<vmem>>, vector<1x1x128xf32>
    %167 = vector.shape_cast %166 : vector<1x1x128xf32> to vector<1x128xf32>
    %168 = vector.broadcast %165 : vector<16x1xf32> to vector<16x128xf32>
    %169 = vector.broadcast %167 : vector<1x128xf32> to vector<16x128xf32>
    %170 = arith.mulf %168, %169 : vector<16x128xf32>
    %171 = arith.addf %164, %170 : vector<16x128xf32>
    %172 = vector.extract_strided_slice %0 {offsets = [0, 24], sizes = [16, 1], strides = [1, 1]} : vector<16x36xf32> to vector<16x1xf32>
    %c0_52 = arith.constant 0 : index
    %c24 = arith.constant 24 : index
    %c0_53 = arith.constant 0 : index
    %173 = vector.load %arg4[%c0_52, %c24, %c0_53] : memref<1x36x128xf32, #tpu.memory_space<vmem>>, vector<1x1x128xf32>
    %174 = vector.shape_cast %173 : vector<1x1x128xf32> to vector<1x128xf32>
    %175 = vector.broadcast %172 : vector<16x1xf32> to vector<16x128xf32>
    %176 = vector.broadcast %174 : vector<1x128xf32> to vector<16x128xf32>
    %177 = arith.mulf %175, %176 : vector<16x128xf32>
    %178 = arith.addf %171, %177 : vector<16x128xf32>
    %179 = vector.extract_strided_slice %0 {offsets = [0, 25], sizes = [16, 1], strides = [1, 1]} : vector<16x36xf32> to vector<16x1xf32>
    %c0_54 = arith.constant 0 : index
    %c25 = arith.constant 25 : index
    %c0_55 = arith.constant 0 : index
    %180 = vector.load %arg4[%c0_54, %c25, %c0_55] : memref<1x36x128xf32, #tpu.memory_space<vmem>>, vector<1x1x128xf32>
    %181 = vector.shape_cast %180 : vector<1x1x128xf32> to vector<1x128xf32>
    %182 = vector.broadcast %179 : vector<16x1xf32> to vector<16x128xf32>
    %183 = vector.broadcast %181 : vector<1x128xf32> to vector<16x128xf32>
    %184 = arith.mulf %182, %183 : vector<16x128xf32>
    %185 = arith.addf %178, %184 : vector<16x128xf32>
    %186 = vector.extract_strided_slice %0 {offsets = [0, 26], sizes = [16, 1], strides = [1, 1]} : vector<16x36xf32> to vector<16x1xf32>
    %c0_56 = arith.constant 0 : index
    %c26 = arith.constant 26 : index
    %c0_57 = arith.constant 0 : index
    %187 = vector.load %arg4[%c0_56, %c26, %c0_57] : memref<1x36x128xf32, #tpu.memory_space<vmem>>, vector<1x1x128xf32>
    %188 = vector.shape_cast %187 : vector<1x1x128xf32> to vector<1x128xf32>
    %189 = vector.broadcast %186 : vector<16x1xf32> to vector<16x128xf32>
    %190 = vector.broadcast %188 : vector<1x128xf32> to vector<16x128xf32>
    %191 = arith.mulf %189, %190 : vector<16x128xf32>
    %192 = arith.addf %185, %191 : vector<16x128xf32>
    %193 = vector.extract_strided_slice %0 {offsets = [0, 27], sizes = [16, 1], strides = [1, 1]} : vector<16x36xf32> to vector<16x1xf32>
    %c0_58 = arith.constant 0 : index
    %c27 = arith.constant 27 : index
    %c0_59 = arith.constant 0 : index
    %194 = vector.load %arg4[%c0_58, %c27, %c0_59] : memref<1x36x128xf32, #tpu.memory_space<vmem>>, vector<1x1x128xf32>
    %195 = vector.shape_cast %194 : vector<1x1x128xf32> to vector<1x128xf32>
    %196 = vector.broadcast %193 : vector<16x1xf32> to vector<16x128xf32>
    %197 = vector.broadcast %195 : vector<1x128xf32> to vector<16x128xf32>
    %198 = arith.mulf %196, %197 : vector<16x128xf32>
    %199 = arith.addf %192, %198 : vector<16x128xf32>
    %200 = vector.extract_strided_slice %0 {offsets = [0, 28], sizes = [16, 1], strides = [1, 1]} : vector<16x36xf32> to vector<16x1xf32>
    %c0_60 = arith.constant 0 : index
    %c28 = arith.constant 28 : index
    %c0_61 = arith.constant 0 : index
    %201 = vector.load %arg4[%c0_60, %c28, %c0_61] : memref<1x36x128xf32, #tpu.memory_space<vmem>>, vector<1x1x128xf32>
    %202 = vector.shape_cast %201 : vector<1x1x128xf32> to vector<1x128xf32>
    %203 = vector.broadcast %200 : vector<16x1xf32> to vector<16x128xf32>
    %204 = vector.broadcast %202 : vector<1x128xf32> to vector<16x128xf32>
    %205 = arith.mulf %203, %204 : vector<16x128xf32>
    %206 = arith.addf %199, %205 : vector<16x128xf32>
    %207 = vector.extract_strided_slice %0 {offsets = [0, 29], sizes = [16, 1], strides = [1, 1]} : vector<16x36xf32> to vector<16x1xf32>
    %c0_62 = arith.constant 0 : index
    %c29 = arith.constant 29 : index
    %c0_63 = arith.constant 0 : index
    %208 = vector.load %arg4[%c0_62, %c29, %c0_63] : memref<1x36x128xf32, #tpu.memory_space<vmem>>, vector<1x1x128xf32>
    %209 = vector.shape_cast %208 : vector<1x1x128xf32> to vector<1x128xf32>
    %210 = vector.broadcast %207 : vector<16x1xf32> to vector<16x128xf32>
    %211 = vector.broadcast %209 : vector<1x128xf32> to vector<16x128xf32>
    %212 = arith.mulf %210, %211 : vector<16x128xf32>
    %213 = arith.addf %206, %212 : vector<16x128xf32>
    %214 = vector.extract_strided_slice %0 {offsets = [0, 30], sizes = [16, 1], strides = [1, 1]} : vector<16x36xf32> to vector<16x1xf32>
    %c0_64 = arith.constant 0 : index
    %c30 = arith.constant 30 : index
    %c0_65 = arith.constant 0 : index
    %215 = vector.load %arg4[%c0_64, %c30, %c0_65] : memref<1x36x128xf32, #tpu.memory_space<vmem>>, vector<1x1x128xf32>
    %216 = vector.shape_cast %215 : vector<1x1x128xf32> to vector<1x128xf32>
    %217 = vector.broadcast %214 : vector<16x1xf32> to vector<16x128xf32>
    %218 = vector.broadcast %216 : vector<1x128xf32> to vector<16x128xf32>
    %219 = arith.mulf %217, %218 : vector<16x128xf32>
    %220 = arith.addf %213, %219 : vector<16x128xf32>
    %221 = vector.extract_strided_slice %0 {offsets = [0, 31], sizes = [16, 1], strides = [1, 1]} : vector<16x36xf32> to vector<16x1xf32>
    %c0_66 = arith.constant 0 : index
    %c31 = arith.constant 31 : index
    %c0_67 = arith.constant 0 : index
    %222 = vector.load %arg4[%c0_66, %c31, %c0_67] : memref<1x36x128xf32, #tpu.memory_space<vmem>>, vector<1x1x128xf32>
    %223 = vector.shape_cast %222 : vector<1x1x128xf32> to vector<1x128xf32>
    %224 = vector.broadcast %221 : vector<16x1xf32> to vector<16x128xf32>
    %225 = vector.broadcast %223 : vector<1x128xf32> to vector<16x128xf32>
    %226 = arith.mulf %224, %225 : vector<16x128xf32>
    %227 = arith.addf %220, %226 : vector<16x128xf32>
    %228 = vector.extract_strided_slice %0 {offsets = [0, 32], sizes = [16, 1], strides = [1, 1]} : vector<16x36xf32> to vector<16x1xf32>
    %c0_68 = arith.constant 0 : index
    %c32 = arith.constant 32 : index
    %c0_69 = arith.constant 0 : index
    %229 = vector.load %arg4[%c0_68, %c32, %c0_69] : memref<1x36x128xf32, #tpu.memory_space<vmem>>, vector<1x1x128xf32>
    %230 = vector.shape_cast %229 : vector<1x1x128xf32> to vector<1x128xf32>
    %231 = vector.broadcast %228 : vector<16x1xf32> to vector<16x128xf32>
    %232 = vector.broadcast %230 : vector<1x128xf32> to vector<16x128xf32>
    %233 = arith.mulf %231, %232 : vector<16x128xf32>
    %234 = arith.addf %227, %233 : vector<16x128xf32>
    %235 = vector.extract_strided_slice %0 {offsets = [0, 33], sizes = [16, 1], strides = [1, 1]} : vector<16x36xf32> to vector<16x1xf32>
    %c0_70 = arith.constant 0 : index
    %c33 = arith.constant 33 : index
    %c0_71 = arith.constant 0 : index
    %236 = vector.load %arg4[%c0_70, %c33, %c0_71] : memref<1x36x128xf32, #tpu.memory_space<vmem>>, vector<1x1x128xf32>
    %237 = vector.shape_cast %236 : vector<1x1x128xf32> to vector<1x128xf32>
    %238 = vector.broadcast %235 : vector<16x1xf32> to vector<16x128xf32>
    %239 = vector.broadcast %237 : vector<1x128xf32> to vector<16x128xf32>
    %240 = arith.mulf %238, %239 : vector<16x128xf32>
    %241 = arith.addf %234, %240 : vector<16x128xf32>
    %242 = vector.extract_strided_slice %0 {offsets = [0, 34], sizes = [16, 1], strides = [1, 1]} : vector<16x36xf32> to vector<16x1xf32>
    %c0_72 = arith.constant 0 : index
    %c34 = arith.constant 34 : index
    %c0_73 = arith.constant 0 : index
    %243 = vector.load %arg4[%c0_72, %c34, %c0_73] : memref<1x36x128xf32, #tpu.memory_space<vmem>>, vector<1x1x128xf32>
    %244 = vector.shape_cast %243 : vector<1x1x128xf32> to vector<1x128xf32>
    %245 = vector.broadcast %242 : vector<16x1xf32> to vector<16x128xf32>
    %246 = vector.broadcast %244 : vector<1x128xf32> to vector<16x128xf32>
    %247 = arith.mulf %245, %246 : vector<16x128xf32>
    %248 = arith.addf %241, %247 : vector<16x128xf32>
    %249 = vector.extract_strided_slice %0 {offsets = [0, 35], sizes = [16, 1], strides = [1, 1]} : vector<16x36xf32> to vector<16x1xf32>
    %c0_74 = arith.constant 0 : index
    %c35 = arith.constant 35 : index
    %c0_75 = arith.constant 0 : index
    %250 = vector.load %arg4[%c0_74, %c35, %c0_75] : memref<1x36x128xf32, #tpu.memory_space<vmem>>, vector<1x1x128xf32>
    %251 = vector.shape_cast %250 : vector<1x1x128xf32> to vector<1x128xf32>
    %252 = vector.broadcast %249 : vector<16x1xf32> to vector<16x128xf32>
    %253 = vector.broadcast %251 : vector<1x128xf32> to vector<16x128xf32>
    %254 = arith.mulf %252, %253 : vector<16x128xf32>
    %255 = arith.addf %248, %254 : vector<16x128xf32>
    %c0_76 = arith.constant 0 : index
    %c0_77 = arith.constant 0 : index
    %c0_78 = arith.constant 0 : index
    %256 = vector.load %arg5[%c0_76, %c0_77, %c0_78] : memref<1x16x128xf32, #tpu.memory_space<vmem>>, vector<1x16x128xf32>
    %257 = vector.shape_cast %256 : vector<1x16x128xf32> to vector<16x128xf32>
    %258 = vector.shape_cast %255 : vector<16x128xf32> to vector<1x16x128xf32>
    tpu.vector_store %arg5[%c0_76, %c0_77, %c0_78], %258 {strides = array<i32>} : memref<1x16x128xf32, #tpu.memory_space<vmem>>, vector<1x16x128xf32>,
    return
  }
  func.func @transform_0(%arg0: i32, %arg1: i32) -> (i32, i32) {
    %c0_i32 = arith.constant 0 : i32
    %c0_i32_0 = arith.constant 0 : i32
    %c0_i32_1 = arith.constant 0 : i32
    return %c0_i32, %c0_i32_0 : i32, i32
  }
  func.func @transform_1(%arg0: i32, %arg1: i32) -> (i32, i32) {
    %c0_i32 = arith.constant 0 : i32
    %c0_i32_0 = arith.constant 0 : i32
    %c0_i32_1 = arith.constant 0 : i32
    return %c0_i32, %c0_i32_0 : i32, i32
  }
  func.func @transform_2(%arg0: i32, %arg1: i32) -> (i32, i32, i32) {
    %c0_i32 = arith.constant 0 : i32
    %c0_i32_0 = arith.constant 0 : i32
    return %arg0, %c0_i32, %arg1 : i32, i32, i32
  }
  func.func @transform_3(%arg0: i32, %arg1: i32) -> (i32, i32, i32) {
    %c0_i32 = arith.constant 0 : i32
    %c0_i32_0 = arith.constant 0 : i32
    return %arg0, %c0_i32, %arg1 : i32, i32, i32
  }
}

</mosaic_0001>

<llo_original>
// kernel: tile.8
$region0: #{tile.8}
  #allocation0 [shape = 's32[1]{0}', space=sflag, size = 0x4, scoped, tag = 'scoped memory for tile.8']
  %s0 = inlined_call_operand.vmem [shape: f32[4], index: 0, kind: input, shape index: {}]
  %s1 = inlined_call_operand.vmem [shape: f32[4,4], index: 1, kind: output, shape index: {}]
  // Predicated region
  $region2: #{tile.8} parent=0 // pred_check
    _
  $region3: #{tile.8} parent=0 // pred_check_branch
    %3 = sbr.rel (0) target = $region5
  $region4: #{tile.8} parent=0 // pred_region
    _
  $region5: #{tile.8} parent=0 // pred_fallthru
    _
  %v4 = vld [vmem:[%s0] ss:$0 sm:$0xff]
  %5 = vst [vmem:[%s1] sm:$0xf] %v4

// kernel: tile.0
$region0: #{tile.0}
  %s0 = inlined_call_operand.vmem [shape: f32[4,4], index: 0, kind: input, shape index: {}]
  %s1 = inlined_call_operand.vmem [shape: f32[16,1], index: 1, kind: output, shape index: {}]
  $region1: #{tile.0} parent=0
    #allocation0 [shape = 'u8[4096]{0}', space=vmem, size = 0x1000, scoped, tag = 'scoped mem for input reshape']
    %s3 = sshllo.u32 0, 4
    %v4 = vld [vmem:[%s0] sm:%s3]
    %5 = vst [vmem:[#allocation0] sm:%s3] %v4
    %v6 = vld [vmem:[#allocation0] sm:$0xf]
    %vm7 = vcmask 7168
    %8 = vst.msk [vmem:[%s1] ss:$4 sm:$0xf] %vm7, %v6
    %v9 = vld [vmem:[#allocation0] sm:$0xf]
    %10 = vrot.lane.b32.xlu0 %v9, 127
    %v11 = vpop.permute.xlu0 %10
    %vm12 = vcmask 7168
    %s13 = scalar_lea.vmem %s1, 1
    %14 = vst.msk [vmem:[%s13] ss:$4 sm:$0xf] %vm12, %v11
    %v15 = vld [vmem:[#allocation0] sm:$0xf]
    %16 = vrot.lane.b32.xlu0 %v15, 126
    %v17 = vpop.permute.xlu0 %16
    %vm18 = vcmask 7168
    %s19 = scalar_lea.vmem %s1, 2
    %20 = vst.msk [vmem:[%s19] ss:$4 sm:$0xf] %vm18, %v17
    %v21 = vld [vmem:[#allocation0] sm:$0xf]
    %22 = vrot.lane.b32.xlu0 %v21, 125
    %v23 = vpop.permute.xlu0 %22
    %vm24 = vcmask 7168
    %s25 = scalar_lea.vmem %s1, 3
    %26 = vst.msk [vmem:[%s25] ss:$4 sm:$0xf] %vm24, %v23

// kernel: head_forward.1
$region0: #{head_forward.1}
  #allocation0 [shape = 'u32[]', space=smem, size = 0x4, offset = 0x4, fixed_abs, tag = 'smem constant byte address 0x4 - core index']
  #allocation1 [shape = 'u32[144,128]{1,0:T(1,128)}', space=vmem, size = 0x12000, scoped, tag = 'internal scratch']
  %s0 = inlined_call_operand.vmem [shape: f32[16,36], index: 0, kind: input, shape index: {}]
  %s1 = inlined_call_operand.vmem [shape: f32[16,1], index: 1, kind: input, shape index: {}]
  %s2 = inlined_call_operand.vmem [shape: f32[2,36,256], index: 2, kind: input, shape index: {}]
  %s3 = inlined_call_operand.vmem [shape: f32[2,16,256], index: 3, kind: output, shape index: {}]
  %s4 = sld [smem:[#allocation0]]
  $region117: #{head_forward.1} parent=0
    _
  %s6 = ssub.s32 1, %s4
  %s7 = scalar_select 0, %s6, %s4
  $region1: #{head_forward.1} parent=0
    #allocation2 [shape = 'u8[40960]{0}', space=vmem, size = 0xa000, scoped, tag = 'input window, operand 2']
    #allocation3 [shape = 'u8[16384]{0}', space=vmem, size = 0x4000, scoped, tag = 'output window, operand 0']
    loop: start=0, step=1, limit=6
    $region2: #{head_forward.1} parent=1 // loop_pre_header
      _
    $region3: #{head_forward.1} parent=1 // loop_header
      %s9 = sphi 0, %s13
      %p10 = scmp.ge.s32.totalorder %s9, 6
      %s16 = sphi 0, %s28
      %s17 = sphi 0, %s24
      %s18 = sphi 0, %s16
      %s19 = sphi 0, %s17
      %s20 = sphi 0, %s18
      %s21 = sphi 0, %s19
      %s29 = sphi 0, %s29
      %s31 = sphi 0, %s29
      %s32 = sphi 0, %s31
      %s46 = sphi 0, %s32
      %s50 = sphi 0, %s50
      %s52 = sphi 0, %s50
      %s53 = sphi 0, %s52
      %s67 = sphi 0, %s53
      %s75 = sphi 0, %s77
      %s78 = sphi 0, %s75
      %s79 = sphi 0, %s78
      %s95 = sphi 0, %s79
      %s103 = sphi 0, %s105
      %s106 = sphi 0, %s103
      %s107 = sphi 0, %s106
      %s123 = sphi 0, %s107
    $region4: #{head_forward.1} parent=1 // loop_header_branch
      %12 = sbr.rel (%p10) target = $region8
    $region5: #{head_forward.1} parent=1 // loop_body
      %s14 = ssub.s32 %s9, 1
      %s15 = ssub.s32 %s9, 2
      %s22 = sadd.s32 1, %s17
      %p23 = scmp.ge.s32.totalorder %s22, 2
      %s24 = scalar_select %p23, 0, %s22
      %s25 = sadd.s32 1, %s16
      %s26 = scalar_select %p23, %s25, %s16
      %p27 = scmp.ge.s32.totalorder %s26, 2
      %s28 = scalar_select %p27, 0, %s26
      %s30 = sadd.s32 %s29, 1
      %p33 = scmp.eq.s32.totalorder %s9, 3
      %p34 = scmp.ne.s32.totalorder %s29, %s31
      %p35 = scmp.eq.s32.totalorder %s9, 0
      %p36 = por %p34, %p35
      %p37 = scmp.ne.s32.totalorder %s29, %s31
      %p38 = scmp.eq.s32.totalorder %s14, 3
      %p39 = por %p37, %p38
      %p40 = scmp.ne.s32.totalorder %s31, %s32
      %p41 = scmp.eq.s32.totalorder %s14, 0
      %p42 = por %p40, %p41
      %p43 = scmp.ne.s32.totalorder %s31, %s32
      %p44 = scmp.eq.s32.totalorder %s15, 3
      %p45 = por %p43, %p44
      %p47 = scmp.ne.s32.totalorder %s32, %s46
      %p48 = scmp.eq.s32.totalorder %s15, 0
      %p49 = por %p47, %p48
      %s51 = sadd.s32 %s50, 1
      %p54 = scmp.eq.s32.totalorder %s9, 3
      %p55 = scmp.ne.s32.totalorder %s50, %s52
      %p56 = scmp.eq.s32.totalorder %s9, 0
      %p57 = por %p55, %p56
      %p58 = scmp.ne.s32.totalorder %s50, %s52
      %p59 = scmp.eq.s32.totalorder %s14, 3
      %p60 = por %p58, %p59
      %p61 = scmp.ne.s32.totalorder %s52, %s53
      %p62 = scmp.eq.s32.totalorder %s14, 0
      %p63 = por %p61, %p62
      %p64 = scmp.ne.s32.totalorder %s52, %s53
      %p65 = scmp.eq.s32.totalorder %s15, 3
      %p66 = por %p64, %p65
      %p68 = scmp.ne.s32.totalorder %s53, %s67
      %p69 = scmp.eq.s32.totalorder %s15, 0
      %p70 = por %p68, %p69
      %s71 = ssub.s32 %s16, %s28
      %s72 = ssub.s32 %s17, %s24
      %s73 = sor.u32 %s71, %s72
      %p74 = scmp.eq.s32.totalorder %s73, 0
      %s76 = sadd.s32 %s75, 1
      %s77 = scalar_select %p74, %s75, %s76
      %p80 = pneg %p74
      %p81 = scmp.eq.s32.totalorder %s9, 3
      %p82 = por %p80, %p81
      %p83 = scmp.ne.s32.totalorder %s75, %s78
      %p84 = scmp.eq.s32.totalorder %s9, 0
      %p85 = por %p83, %p84
      %p86 = scmp.ne.s32.totalorder %s75, %s78
      %p87 = scmp.eq.s32.totalorder %s14, 3
      %p88 = por %p86, %p87
      %p89 = scmp.ne.s32.totalorder %s78, %s79
      %p90 = scmp.eq.s32.totalorder %s14, 0
      %p91 = por %p89, %p90
      %p92 = scmp.ne.s32.totalorder %s78, %s79
      %p93 = scmp.eq.s32.totalorder %s15, 3
      %p94 = por %p92, %p93
      %p96 = scmp.ne.s32.totalorder %s79, %s95
      %p97 = scmp.eq.s32.totalorder %s15, 0
      %p98 = por %p96, %p97
      %s99 = ssub.s32 %s16, %s28
      %s100 = ssub.s32 %s17, %s24
      %s101 = sor.u32 %s99, %s100
      %p102 = scmp.eq.s32.totalorder %s101, 0
      %s104 = sadd.s32 %s103, 1
      %s105 = scalar_select %p102, %s103, %s104
      %p108 = pneg %p102
      %p109 = scmp.eq.s32.totalorder %s9, 3
      %p110 = por %p108, %p109
      %p111 = scmp.ne.s32.totalorder %s103, %s106
      %p112 = scmp.eq.s32.totalorder %s9, 0
      %p113 = por %p111, %p112
      %p114 = scmp.ne.s32.totalorder %s103, %s106
      %p115 = scmp.eq.s32.totalorder %s14, 3
      %p116 = por %p114, %p115
      %p117 = scmp.ne.s32.totalorder %s106, %s107
      %p118 = scmp.eq.s32.totalorder %s14, 0
      %p119 = por %p117, %p118
      %p120 = scmp.ne.s32.totalorder %s106, %s107
      %p121 = scmp.eq.s32.totalorder %s15, 3
      %p122 = por %p120, %p121
      %p124 = scmp.ne.s32.totalorder %s107, %s123
      %p125 = scmp.eq.s32.totalorder %s15, 0
      %p126 = por %p124, %p125
      %p127 = scmp.le.s32.totalorder 1, %s9
      %p128 = scmp.lt.s32.totalorder %s9, 5
      %p129 = pnand %p127, %p128
      %p130 = pneg %p129
      // Predicated region
      $region9: #{head_forward.1} parent=5 // pred_check
        _
      $region10: #{head_forward.1} parent=5 // pred_check_branch
        %132 = sbr.rel (%p129) target = $region12
      $region11: #{head_forward.1} parent=5 // pred_region
        %s133 = ssub.s32 %s9, 1
        // Predicated region
        $region13: #{head_forward.1} parent=11 // pred_check
          %p134 = pneg %p42
        $region14: #{head_forward.1} parent=11 // pred_check_branch
          %136 = sbr.rel (%p134) target = $region16
        $region15: #{head_forward.1} parent=11 // pred_region
          _
        $region16: #{head_forward.1} parent=11 // pred_fallthru
          _
        // Predicated region
        $region17: #{head_forward.1} parent=11 // pred_check
          %p137 = pneg %p63
        $region18: #{head_forward.1} parent=11 // pred_check_branch
          %139 = sbr.rel (%p137) target = $region20
        $region19: #{head_forward.1} parent=11 // pred_region
          _
        $region20: #{head_forward.1} parent=11 // pred_fallthru
          _
      $region12: #{head_forward.1} parent=5 // pred_fallthru
        _
      %p140 = scmp.lt.s32.totalorder %s9, 4
      // Predicated region
      $region21: #{head_forward.1} parent=5 // pred_check
        %p141 = pneg %p140
      $region22: #{head_forward.1} parent=5 // pred_check_branch
        %143 = sbr.rel (%p141) target = $region24
      $region23: #{head_forward.1} parent=5 // pred_region
        // Predicated region
        $region25: #{head_forward.1} parent=23 // pred_check
          %p144 = pneg %p85
        $region26: #{head_forward.1} parent=23 // pred_check_branch
          %146 = sbr.rel (%p144) target = $region28
        $region27: #{head_forward.1} parent=23 // pred_region
          %s147 = sand.u32 %s75, 1
          %s148 = sand.u32 %s75, 1
          %s149 = smul.addr %s148, 40
          %s150 = scalar_lea.vmem [#allocation2], %s149
          %s151 = smul.addr %s16, 10
          %s152 = sadd.s32 %s17, %s151
          %s153 = smul.addr %s152, 8
          %s154 = scalar_lea.vmem %s2, %s153
          // Predicated region
          $region29: #{head_forward.1} parent=27 // pred_check
            _
          $region30: #{head_forward.1} parent=27 // pred_check_branch
            %156 = sbr.rel (0) target = $region32
          $region31: #{head_forward.1} parent=27 // pred_region
            // Predicated region
            $region33: #{head_forward.1} parent=31 // pred_check
              _
            $region34: #{head_forward.1} parent=31 // pred_check_branch
              %158 = sbr.rel (0) target = $region36
            $region35: #{head_forward.1} parent=31 // pred_region
              // Predicated region
              $region48: #{head_forward.1} parent=35 // pred_check
                _
              $region49: #{head_forward.1} parent=35 // pred_check_branch
                %181 = sbr.rel (0) target = $region51
              $region50: #{head_forward.1} parent=35 // pred_region
                loop: start=0, step=1, limit=1
                $region52: #{head_forward.1} parent=50 // loop_pre_header
                  _
                $region53: #{head_forward.1} parent=50 // loop_header
                  %s183 = sphi 0, %s187
                  %p184 = scmp.ge.s32.totalorder %s183, 1
                  %s188 = sphi %s154, %s154
                  %s189 = sphi %s150, %s150
                $region54: #{head_forward.1} parent=50 // loop_header_branch
                  %186 = sbr.rel (%p184) target = $region58
                $region55: #{head_forward.1} parent=50 // loop_body
                  %v190 = vld [vmem:[%s188] sm:$0xff]
                  %191 = vst [vmem:[%s189] sm:$0xff] %v190
                  %v192 = vld [vmem:[%s188 + $0x10] sm:$0xff]
                  %193 = vst [vmem:[%s189 + $0x8] sm:$0xff] %v192
                  %v194 = vld [vmem:[%s188 + $0x20] sm:$0xff]
                  %195 = vst [vmem:[%s189 + $0x10] sm:$0xff] %v194
                  %v196 = vld [vmem:[%s188 + $0x30] sm:$0xff]
                  %197 = vst [vmem:[%s189 + $0x18] sm:$0xff] %v196
                  %v198 = vld [vmem:[%s188 + $0x40] sm:$0xff]
                  %199 = vst [vmem:[%s189 + $0x20] sm:$0xff] %v198
                $region56: #{head_forward.1} parent=50 // loop_footer
                  %s187 = sadd.s32 1, %s183
                $region57: #{head_forward.1} parent=50 // loop_footer_branch
                  %182 = sbr.rel target = $region53
                $region58: #{head_forward.1} parent=50 // loop_exit
                  _
              $region51: #{head_forward.1} parent=35 // pred_fallthru
                _
              // Predicated region
              $region59: #{head_forward.1} parent=35 // pred_check
                _
              $region60: #{head_forward.1} parent=35 // pred_check_branch
                %201 = sbr.rel target = $region62
              $region61: #{head_forward.1} parent=35 // pred_region
                _
              $region62: #{head_forward.1} parent=35 // pred_fallthru
                _
            $region36: #{head_forward.1} parent=31 // pred_fallthru
              _
            // Predicated region
            $region37: #{head_forward.1} parent=31 // pred_check
              _
            $region38: #{head_forward.1} parent=31 // pred_check_branch
              %160 = sbr.rel target = $region40
            $region39: #{head_forward.1} parent=31 // pred_region
              loop: start=0, step=1, limit=1
              $region41: #{head_forward.1} parent=39 // loop_pre_header
                _
              $region42: #{head_forward.1} parent=39 // loop_header
                %s163 = sphi 0, %s167
                %p164 = scmp.ge.s32.totalorder %s163, 1
                %s168 = sphi %s154, %s154
                %s169 = sphi %s150, %s150
              $region43: #{head_forward.1} parent=39 // loop_header_branch
                %166 = sbr.rel (%p164) target = $region47
              $region44: #{head_forward.1} parent=39 // loop_body
                %v170 = vld [vmem:[%s168] sm:$0xff]
                %171 = vst [vmem:[%s169] sm:$0xff] %v170
                %v172 = vld [vmem:[%s168 + $0x10] sm:$0xff]
                %173 = vst [vmem:[%s169 + $0x8] sm:$0xff] %v172
                %v174 = vld [vmem:[%s168 + $0x20] sm:$0xff]
                %175 = vst [vmem:[%s169 + $0x10] sm:$0xff] %v174
                %v176 = vld [vmem:[%s168 + $0x30] sm:$0xff]
                %177 = vst [vmem:[%s169 + $0x18] sm:$0xff] %v176
                %v178 = vld [vmem:[%s168 + $0x40] sm:$0xff]
                %179 = vst [vmem:[%s169 + $0x20] sm:$0xff] %v178
              $region45: #{head_forward.1} parent=39 // loop_footer
                %s167 = sadd.s32 1, %s163
              $region46: #{head_forward.1} parent=39 // loop_footer_branch
                %162 = sbr.rel target = $region42
              $region47: #{head_forward.1} parent=39 // loop_exit
                _
            $region40: #{head_forward.1} parent=31 // pred_fallthru
              _
          $region32: #{head_forward.1} parent=27 // pred_fallthru
            _
          %202 = vnop
        $region28: #{head_forward.1} parent=23 // pred_fallthru
          _
      $region24: #{head_forward.1} parent=5 // pred_fallthru
        _
      %p203 = scmp.le.s32.totalorder 1, %s9
      %p204 = scmp.lt.s32.totalorder %s9, 5
      %p205 = pnand %p203, %p204
      %p206 = pneg %p205
      // Predicated region
      $region63: #{head_forward.1} parent=5 // pred_check
        _
      $region64: #{head_forward.1} parent=5 // pred_check_branch
        %208 = sbr.rel (%p205) target = $region66
      $region65: #{head_forward.1} parent=5 // pred_region
        %s209 = ssub.s32 %s9, 1
        %s210 = sand.u32 %s78, 1
        %s211 = sand.u32 %s78, 1
        %s212 = smul.addr %s211, 40
        %s213 = scalar_lea.vmem [#allocation2], %s212
        // Predicated region
        $region67: #{head_forward.1} parent=65 // pred_check
          %p214 = pneg %p91
        $region68: #{head_forward.1} parent=65 // pred_check_branch
          %216 = sbr.rel (%p214) target = $region70
        $region69: #{head_forward.1} parent=65 // pred_region
          _
        $region70: #{head_forward.1} parent=65 // pred_fallthru
          _
        %p217 = pneg %p42
        %p218 = pneg %p39
        %p219 = pneg %p63
        %p220 = pneg %p60
        %s221 = sand.u32 %s78, 1
        %s222 = sand.u32 %s78, 1
        %s223 = smul.addr %s222, 40
        %s224 = scalar_lea.vmem [#allocation2], %s223
        %p225 = pneg %p91
        %p226 = pneg %p88
        %p227 = pneg %p119
        %p228 = pneg %p116
        %s229 = sand.u32 %s106, 1
        %s230 = sand.u32 %s106, 1
        %s231 = smul.addr %s230, 16
        %s232 = scalar_lea.vmem [#allocation3], %s231
        %v233 = vld [vmem:[%s0] sm:$0xff]
        %v234 = vld [vmem:[%s0 + $0x8] sm:$0xff]
        %v235 = vld [vmem:[%s1] sm:$0xff]
        %v236 = vld [vmem:[%s1 + $0x8] sm:$0xff]
        %238 = vset.pattern.permute.xlu0 0
        %239 = vperm.xlu0 %238, %v235
        %v240 = vpop.permute.xlu0 %239
        %243 = vset.pattern.permute.xlu0 0
        %244 = vperm.xlu0 %243, %v236
        %v245 = vpop.permute.xlu0 %244
        %v247 = vld [vmem:[%s213] sm:$0x1]
        %249 = vset.pattern.permute.xlu0 0
        %250 = vperm.xlu0 %249, %v233
        %v251 = vpop.permute.xlu0 %250
        %254 = vset.pattern.permute.xlu0 0
        %255 = vperm.xlu0 %254, %v234
        %v256 = vpop.permute.xlu0 %255
        %v258 = vlaneseq
        %v259 = vshrl.u32 %v258, 7
        %v260 = vsub.s32 0, %v259
        %v261 = vrot.slane %v247, %v260
        %v262 = vmul.f32 %v251, %v261
        %v263 = vmul.f32 %v256, %v261
        %v264 = vadd.f32 %v240, %v262
        %v265 = vadd.f32 %v245, %v263
        %v266 = vld [vmem:[%s213 + $0x1] sm:$0x1]
        %267 = vset.pattern.permute.xlu0 1
        %268 = vperm.xlu0 %267, %v233
        %v269 = vpop.permute.xlu0 %268
        %271 = vset.pattern.permute.xlu0 1
        %272 = vperm.xlu0 %271, %v234
        %v273 = vpop.permute.xlu0 %272
        %v275 = vlaneseq
        %v276 = vshrl.u32 %v275, 7
        %v277 = vsub.s32 0, %v276
        %v278 = vrot.slane %v266, %v277
        %v279 = vmul.f32 %v269, %v278
        %v280 = vmul.f32 %v273, %v278
        %v281 = vadd.f32 %v264, %v279
        %v282 = vadd.f32 %v265, %v280
        %v283 = vld [vmem:[%s213 + $0x2] sm:$0x1]
        %284 = vset.pattern.permute.xlu0 2
        %285 = vperm.xlu0 %284, %v233
        %v286 = vpop.permute.xlu0 %285
        %288 = vset.pattern.permute.xlu0 2
        %289 = vperm.xlu0 %288, %v234
        %v290 = vpop.permute.xlu0 %289
        %v292 = vlaneseq
        %v293 = vshrl.u32 %v292, 7
        %v294 = vsub.s32 0, %v293
        %v295 = vrot.slane %v283, %v294
        %v296 = vmul.f32 %v286, %v295
        %v297 = vmul.f32 %v290, %v295
        %v298 = vadd.f32 %v281, %v296
        %v299 = vadd.f32 %v282, %v297
        %v300 = vld [vmem:[%s213 + $0x3] sm:$0x1]
        %301 = vset.pattern.permute.xlu0 3
        %302 = vperm.xlu0 %301, %v233
        %v303 = vpop.permute.xlu0 %302
        %305 = vset.pattern.permute.xlu0 3
        %306 = vperm.xlu0 %305, %v234
        %v307 = vpop.permute.xlu0 %306
        %v309 = vlaneseq
        %v310 = vshrl.u32 %v309, 7
        %v311 = vsub.s32 0, %v310
        %v312 = vrot.slane %v300, %v311
        %v313 = vmul.f32 %v303, %v312
        %v314 = vmul.f32 %v307, %v312
        %v315 = vadd.f32 %v298, %v313
        %v316 = vadd.f32 %v299, %v314
        %v317 = vld [vmem:[%s213 + $0x4] sm:$0x1]
        %318 = vset.pattern.permute.xlu0 4
        %319 = vperm.xlu0 %318, %v233
        %v320 = vpop.permute.xlu0 %319
        %322 = vset.pattern.permute.xlu0 4
        %323 = vperm.xlu0 %322, %v234
        %v324 = vpop.permute.xlu0 %323
        %v326 = vlaneseq
        %v327 = vshrl.u32 %v326, 7
        %v328 = vsub.s32 0, %v327
        %v329 = vrot.slane %v317, %v328
        %v330 = vmul.f32 %v320, %v329
        %v331 = vmul.f32 %v324, %v329
        %v332 = vadd.f32 %v315, %v330
        %v333 = vadd.f32 %v316, %v331
        %v334 = vld [vmem:[%s213 + $0x5] sm:$0x1]
        %335 = vset.pattern.permute.xlu0 5
        %336 = vperm.xlu0 %335, %v233
        %v337 = vpop.permute.xlu0 %336
        %339 = vset.pattern.permute.xlu0 5
        %340 = vperm.xlu0 %339, %v234
        %v341 = vpop.permute.xlu0 %340
        %v343 = vlaneseq
        %v344 = vshrl.u32 %v343, 7
        %v345 = vsub.s32 0, %v344
        %v346 = vrot.slane %v334, %v345
        %v347 = vmul.f32 %v337, %v346
        %v348 = vmul.f32 %v341, %v346
        %v349 = vadd.f32 %v332, %v347
        %v350 = vadd.f32 %v333, %v348
        %v351 = vld [vmem:[%s213 + $0x6] sm:$0x1]
        %352 = vset.pattern.permute.xlu0 6
        %353 = vperm.xlu0 %352, %v233
        %v354 = vpop.permute.xlu0 %353
        %356 = vset.pattern.permute.xlu0 6
        %357 = vperm.xlu0 %356, %v234
        %v358 = vpop.permute.xlu0 %357
        %v360 = vlaneseq
        %v361 = vshrl.u32 %v360, 7
        %v362 = vsub.s32 0, %v361
        %v363 = vrot.slane %v351, %v362
        %v364 = vmul.f32 %v354, %v363
        %v365 = vmul.f32 %v358, %v363
        %v366 = vadd.f32 %v349, %v364
        %v367 = vadd.f32 %v350, %v365
        %v368 = vld [vmem:[%s213 + $0x7] sm:$0x1]
        %369 = vset.pattern.permute.xlu0 7
        %370 = vperm.xlu0 %369, %v233
        %v371 = vpop.permute.xlu0 %370
        %373 = vset.pattern.permute.xlu0 7
        %374 = vperm.xlu0 %373, %v234
        %v375 = vpop.permute.xlu0 %374
        %v377 = vlaneseq
        %v378 = vshrl.u32 %v377, 7
        %v379 = vsub.s32 0, %v378
        %v380 = vrot.slane %v368, %v379
        %v381 = vmul.f32 %v371, %v380
        %v382 = vmul.f32 %v375, %v380
        %v383 = vadd.f32 %v366, %v381
        %v384 = vadd.f32 %v367, %v382
        %v385 = vld [vmem:[%s213 + $0x8] sm:$0x1]
        %386 = vset.pattern.permute.xlu0 8
        %387 = vperm.xlu0 %386, %v233
        %v388 = vpop.permute.xlu0 %387
        %390 = vset.pattern.permute.xlu0 8
        %391 = vperm.xlu0 %390, %v234
        %v392 = vpop.permute.xlu0 %391
        %v394 = vlaneseq
        %v395 = vshrl.u32 %v394, 7
        %v396 = vsub.s32 0, %v395
        %v397 = vrot.slane %v385, %v396
        %v398 = vmul.f32 %v388, %v397
        %v399 = vmul.f32 %v392, %v397
        %v400 = vadd.f32 %v383, %v398
        %v401 = vadd.f32 %v384, %v399
        %v402 = vld [vmem:[%s213 + $0x9] sm:$0x1]
        %403 = vset.pattern.permute.xlu0 9
        %404 = vperm.xlu0 %403, %v233
        %v405 = vpop.permute.xlu0 %404
        %407 = vset.pattern.permute.xlu0 9
        %408 = vperm.xlu0 %407, %v234
        %v409 = vpop.permute.xlu0 %408
        %v411 = vlaneseq
        %v412 = vshrl.u32 %v411, 7
        %v413 = vsub.s32 0, %v412
        %v414 = vrot.slane %v402, %v413
        %v415 = vmul.f32 %v405, %v414
        %v416 = vmul.f32 %v409, %v414
        %v417 = vadd.f32 %v400, %v415
        %v418 = vadd.f32 %v401, %v416
        %v419 = vld [vmem:[%s213 + $0xa] sm:$0x1]
        %420 = vset.pattern.permute.xlu0 10
        %421 = vperm.xlu0 %420, %v233
        %v422 = vpop.permute.xlu0 %421
        %424 = vset.pattern.permute.xlu0 10
        %425 = vperm.xlu0 %424, %v234
        %v426 = vpop.permute.xlu0 %425
        %v428 = vlaneseq
        %v429 = vshrl.u32 %v428, 7
        %v430 = vsub.s32 0, %v429
        %v431 = vrot.slane %v419, %v430
        %v432 = vmul.f32 %v422, %v431
        %v433 = vmul.f32 %v426, %v431
        %v434 = vadd.f32 %v417, %v432
        %v435 = vadd.f32 %v418, %v433
        %v436 = vld [vmem:[%s213 + $0xb] sm:$0x1]
        %437 = vset.pattern.permute.xlu0 11
        %438 = vperm.xlu0 %437, %v233
        %v439 = vpop.permute.xlu0 %438
        %441 = vset.pattern.permute.xlu0 11
        %442 = vperm.xlu0 %441, %v234
        %v443 = vpop.permute.xlu0 %442
        %v445 = vlaneseq
        %v446 = vshrl.u32 %v445, 7
        %v447 = vsub.s32 0, %v446
        %v448 = vrot.slane %v436, %v447
        %v449 = vmul.f32 %v439, %v448
        %v450 = vmul.f32 %v443, %v448
        %v451 = vadd.f32 %v434, %v449
        %v452 = vadd.f32 %v435, %v450
        %v453 = vld [vmem:[%s213 + $0xc] sm:$0x1]
        %454 = vset.pattern.permute.xlu0 12
        %455 = vperm.xlu0 %454, %v233
        %v456 = vpop.permute.xlu0 %455
        %458 = vset.pattern.permute.xlu0 12
        %459 = vperm.xlu0 %458, %v234
        %v460 = vpop.permute.xlu0 %459
        %v462 = vlaneseq
        %v463 = vshrl.u32 %v462, 7
        %v464 = vsub.s32 0, %v463
        %v465 = vrot.slane %v453, %v464
        %v466 = vmul.f32 %v456, %v465
        %v467 = vmul.f32 %v460, %v465
        %v468 = vadd.f32 %v451, %v466
        %v469 = vadd.f32 %v452, %v467
        %v470 = vld [vmem:[%s213 + $0xd] sm:$0x1]
        %471 = vset.pattern.permute.xlu0 13
        %472 = vperm.xlu0 %471, %v233
        %v473 = vpop.permute.xlu0 %472
        %475 = vset.pattern.permute.xlu0 13
        %476 = vperm.xlu0 %475, %v234
        %v477 = vpop.permute.xlu0 %476
        %v479 = vlaneseq
        %v480 = vshrl.u32 %v479, 7
        %v481 = vsub.s32 0, %v480
        %v482 = vrot.slane %v470, %v481
        %v483 = vmul.f32 %v473, %v482
        %v484 = vmul.f32 %v477, %v482
        %v485 = vadd.f32 %v468, %v483
        %v486 = vadd.f32 %v469, %v484
        %v487 = vld [vmem:[%s213 + $0xe] sm:$0x1]
        %488 = vset.pattern.permute.xlu0 14
        %489 = vperm.xlu0 %488, %v233
        %v490 = vpop.permute.xlu0 %489
        %492 = vset.pattern.permute.xlu0 14
        %493 = vperm.xlu0 %492, %v234
        %v494 = vpop.permute.xlu0 %493
        %v496 = vlaneseq
        %v497 = vshrl.u32 %v496, 7
        %v498 = vsub.s32 0, %v497
        %v499 = vrot.slane %v487, %v498
        %v500 = vmul.f32 %v490, %v499
        %v501 = vmul.f32 %v494, %v499
        %v502 = vadd.f32 %v485, %v500
        %v503 = vadd.f32 %v486, %v501
        %v504 = vld [vmem:[%s213 + $0xf] sm:$0x1]
        %505 = vset.pattern.permute.xlu0 15
        %506 = vperm.xlu0 %505, %v233
        %v507 = vpop.permute.xlu0 %506
        %509 = vset.pattern.permute.xlu0 15
        %510 = vperm.xlu0 %509, %v234
        %v511 = vpop.permute.xlu0 %510
        %v513 = vlaneseq
        %v514 = vshrl.u32 %v513, 7
        %v515 = vsub.s32 0, %v514
        %v516 = vrot.slane %v504, %v515
        %v517 = vmul.f32 %v507, %v516
        %v518 = vmul.f32 %v511, %v516
        %v519 = vadd.f32 %v502, %v517
        %v520 = vadd.f32 %v503, %v518
        %v521 = vld [vmem:[%s213 + $0x10] sm:$0x1]
        %522 = vset.pattern.permute.xlu0 16
        %523 = vperm.xlu0 %522, %v233
        %v524 = vpop.permute.xlu0 %523
        %526 = vset.pattern.permute.xlu0 16
        %527 = vperm.xlu0 %526, %v234
        %v528 = vpop.permute.xlu0 %527
        %v530 = vlaneseq
        %v531 = vshrl.u32 %v530, 7
        %v532 = vsub.s32 0, %v531
        %v533 = vrot.slane %v521, %v532
        %v534 = vmul.f32 %v524, %v533
        %v535 = vmul.f32 %v528, %v533
        %v536 = vadd.f32 %v519, %v534
        %v537 = vadd.f32 %v520, %v535
        %v538 = vld [vmem:[%s213 + $0x11] sm:$0x1]
        %539 = vset.pattern.permute.xlu0 17
        %540 = vperm.xlu0 %539, %v233
        %v541 = vpop.permute.xlu0 %540
        %543 = vset.pattern.permute.xlu0 17
        %544 = vperm.xlu0 %543, %v234
        %v545 = vpop.permute.xlu0 %544
        %v547 = vlaneseq
        %v548 = vshrl.u32 %v547, 7
        %v549 = vsub.s32 0, %v548
        %v550 = vrot.slane %v538, %v549
        %v551 = vmul.f32 %v541, %v550
        %v552 = vmul.f32 %v545, %v550
        %v553 = vadd.f32 %v536, %v551
        %v554 = vadd.f32 %v537, %v552
        %v555 = vld [vmem:[%s213 + $0x12] sm:$0x1]
        %556 = vset.pattern.permute.xlu0 18
        %557 = vperm.xlu0 %556, %v233
        %v558 = vpop.permute.xlu0 %557
        %560 = vset.pattern.permute.xlu0 18
        %561 = vperm.xlu0 %560, %v234
        %v562 = vpop.permute.xlu0 %561
        %v564 = vlaneseq
        %v565 = vshrl.u32 %v564, 7
        %v566 = vsub.s32 0, %v565
        %v567 = vrot.slane %v555, %v566
        %v568 = vmul.f32 %v558, %v567
        %v569 = vmul.f32 %v562, %v567
        %v570 = vadd.f32 %v553, %v568
        %v571 = vadd.f32 %v554, %v569
        %v572 = vld [vmem:[%s213 + $0x13] sm:$0x1]
        %573 = vset.pattern.permute.xlu0 19
        %574 = vperm.xlu0 %573, %v233
        %v575 = vpop.permute.xlu0 %574
        %577 = vset.pattern.permute.xlu0 19
        %578 = vperm.xlu0 %577, %v234
        %v579 = vpop.permute.xlu0 %578
        %v581 = vlaneseq
        %v582 = vshrl.u32 %v581, 7
        %v583 = vsub.s32 0, %v582
        %v584 = vrot.slane %v572, %v583
        %v585 = vmul.f32 %v575, %v584
        %v586 = vmul.f32 %v579, %v584
        %v587 = vadd.f32 %v570, %v585
        %v588 = vadd.f32 %v571, %v586
        %v589 = vld [vmem:[%s213 + $0x14] sm:$0x1]
        %590 = vset.pattern.permute.xlu0 20
        %591 = vperm.xlu0 %590, %v233
        %v592 = vpop.permute.xlu0 %591
        %594 = vset.pattern.permute.xlu0 20
        %595 = vperm.xlu0 %594, %v234
        %v596 = vpop.permute.xlu0 %595
        %v598 = vlaneseq
        %v599 = vshrl.u32 %v598, 7
        %v600 = vsub.s32 0, %v599
        %v601 = vrot.slane %v589, %v600
        %v602 = vmul.f32 %v592, %v601
        %v603 = vmul.f32 %v596, %v601
        %v604 = vadd.f32 %v587, %v602
        %v605 = vadd.f32 %v588, %v603
        %v606 = vld [vmem:[%s213 + $0x15] sm:$0x1]
        %607 = vset.pattern.permute.xlu0 21
        %608 = vperm.xlu0 %607, %v233
        %v609 = vpop.permute.xlu0 %608
        %611 = vset.pattern.permute.xlu0 21
        %612 = vperm.xlu0 %611, %v234
        %v613 = vpop.permute.xlu0 %612
        %v615 = vlaneseq
        %v616 = vshrl.u32 %v615, 7
        %v617 = vsub.s32 0, %v616
        %v618 = vrot.slane %v606, %v617
        %v619 = vmul.f32 %v609, %v618
        %v620 = vmul.f32 %v613, %v618
        %v621 = vadd.f32 %v604, %v619
        %v622 = vadd.f32 %v605, %v620
        %v623 = vld [vmem:[%s213 + $0x16] sm:$0x1]
        %624 = vset.pattern.permute.xlu0 22
        %625 = vperm.xlu0 %624, %v233
        %v626 = vpop.permute.xlu0 %625
        %628 = vset.pattern.permute.xlu0 22
        %629 = vperm.xlu0 %628, %v234
        %v630 = vpop.permute.xlu0 %629
        %v632 = vlaneseq
        %v633 = vshrl.u32 %v632, 7
        %v634 = vsub.s32 0, %v633
        %v635 = vrot.slane %v623, %v634
        %v636 = vmul.f32 %v626, %v635
        %v637 = vmul.f32 %v630, %v635
        %v638 = vadd.f32 %v621, %v636
        %v639 = vadd.f32 %v622, %v637
        %v640 = vld [vmem:[%s213 + $0x17] sm:$0x1]
        %641 = vset.pattern.permute.xlu0 23
        %642 = vperm.xlu0 %641, %v233
        %v643 = vpop.permute.xlu0 %642
        %645 = vset.pattern.permute.xlu0 23
        %646 = vperm.xlu0 %645, %v234
        %v647 = vpop.permute.xlu0 %646
        %v649 = vlaneseq
        %v650 = vshrl.u32 %v649, 7
        %v651 = vsub.s32 0, %v650
        %v652 = vrot.slane %v640, %v651
        %v653 = vmul.f32 %v643, %v652
        %v654 = vmul.f32 %v647, %v652
        %v655 = vadd.f32 %v638, %v653
        %v656 = vadd.f32 %v639, %v654
        %v657 = vld [vmem:[%s213 + $0x18] sm:$0x1]
        %658 = vset.pattern.permute.xlu0 24
        %659 = vperm.xlu0 %658, %v233
        %v660 = vpop.permute.xlu0 %659
        %662 = vset.pattern.permute.xlu0 24
        %663 = vperm.xlu0 %662, %v234
        %v664 = vpop.permute.xlu0 %663
        %v666 = vlaneseq
        %v667 = vshrl.u32 %v666, 7
        %v668 = vsub.s32 0, %v667
        %v669 = vrot.slane %v657, %v668
        %v670 = vmul.f32 %v660, %v669
        %v671 = vmul.f32 %v664, %v669
        %v672 = vadd.f32 %v655, %v670
        %v673 = vadd.f32 %v656, %v671
        %v674 = vld [vmem:[%s213 + $0x19] sm:$0x1]
        %675 = vset.pattern.permute.xlu0 25
        %676 = vperm.xlu0 %675, %v233
        %v677 = vpop.permute.xlu0 %676
        %679 = vset.pattern.permute.xlu0 25
        %680 = vperm.xlu0 %679, %v234
        %v681 = vpop.permute.xlu0 %680
        %v683 = vlaneseq
        %v684 = vshrl.u32 %v683, 7
        %v685 = vsub.s32 0, %v684
        %v686 = vrot.slane %v674, %v685
        %v687 = vmul.f32 %v677, %v686
        %v688 = vmul.f32 %v681, %v686
        %v689 = vadd.f32 %v672, %v687
        %v690 = vadd.f32 %v673, %v688
        %v691 = vld [vmem:[%s213 + $0x1a] sm:$0x1]
        %692 = vset.pattern.permute.xlu0 26
        %693 = vperm.xlu0 %692, %v233
        %v694 = vpop.permute.xlu0 %693
        %696 = vset.pattern.permute.xlu0 26
        %697 = vperm.xlu0 %696, %v234
        %v698 = vpop.permute.xlu0 %697
        %v700 = vlaneseq
        %v701 = vshrl.u32 %v700, 7
        %v702 = vsub.s32 0, %v701
        %v703 = vrot.slane %v691, %v702
        %v704 = vmul.f32 %v694, %v703
        %v705 = vmul.f32 %v698, %v703
        %v706 = vadd.f32 %v689, %v704
        %v707 = vadd.f32 %v690, %v705
        %v708 = vld [vmem:[%s213 + $0x1b] sm:$0x1]
        %709 = vset.pattern.permute.xlu0 27
        %710 = vperm.xlu0 %709, %v233
        %v711 = vpop.permute.xlu0 %710
        %713 = vset.pattern.permute.xlu0 27
        %714 = vperm.xlu0 %713, %v234
        %v715 = vpop.permute.xlu0 %714
        %v717 = vlaneseq
        %v718 = vshrl.u32 %v717, 7
        %v719 = vsub.s32 0, %v718
        %v720 = vrot.slane %v708, %v719
        %v721 = vmul.f32 %v711, %v720
        %v722 = vmul.f32 %v715, %v720
        %v723 = vadd.f32 %v706, %v721
        %v724 = vadd.f32 %v707, %v722
        %v725 = vld [vmem:[%s213 + $0x1c] sm:$0x1]
        %726 = vset.pattern.permute.xlu0 28
        %727 = vperm.xlu0 %726, %v233
        %v728 = vpop.permute.xlu0 %727
        %730 = vset.pattern.permute.xlu0 28
        %731 = vperm.xlu0 %730, %v234
        %v732 = vpop.permute.xlu0 %731
        %v734 = vlaneseq
        %v735 = vshrl.u32 %v734, 7
        %v736 = vsub.s32 0, %v735
        %v737 = vrot.slane %v725, %v736
        %v738 = vmul.f32 %v728, %v737
        %v739 = vmul.f32 %v732, %v737
        %v740 = vadd.f32 %v723, %v738
        %v741 = vadd.f32 %v724, %v739
        %v742 = vld [vmem:[%s213 + $0x1d] sm:$0x1]
        %743 = vset.pattern.permute.xlu0 29
        %744 = vperm.xlu0 %743, %v233
        %v745 = vpop.permute.xlu0 %744
        %747 = vset.pattern.permute.xlu0 29
        %748 = vperm.xlu0 %747, %v234
        %v749 = vpop.permute.xlu0 %748
        %v751 = vlaneseq
        %v752 = vshrl.u32 %v751, 7
        %v753 = vsub.s32 0, %v752
        %v754 = vrot.slane %v742, %v753
        %v755 = vmul.f32 %v745, %v754
        %v756 = vmul.f32 %v749, %v754
        %v757 = vadd.f32 %v740, %v755
        %v758 = vadd.f32 %v741, %v756
        %v759 = vld [vmem:[%s213 + $0x1e] sm:$0x1]
        %760 = vset.pattern.permute.xlu0 30
        %761 = vperm.xlu0 %760, %v233
        %v762 = vpop.permute.xlu0 %761
        %764 = vset.pattern.permute.xlu0 30
        %765 = vperm.xlu0 %764, %v234
        %v766 = vpop.permute.xlu0 %765
        %v768 = vlaneseq
        %v769 = vshrl.u32 %v768, 7
        %v770 = vsub.s32 0, %v769
        %v771 = vrot.slane %v759, %v770
        %v772 = vmul.f32 %v762, %v771
        %v773 = vmul.f32 %v766, %v771
        %v774 = vadd.f32 %v757, %v772
        %v775 = vadd.f32 %v758, %v773
        %v776 = vld [vmem:[%s213 + $0x1f] sm:$0x1]
        %777 = vset.pattern.permute.xlu0 31
        %778 = vperm.xlu0 %777, %v233
        %v779 = vpop.permute.xlu0 %778
        %781 = vset.pattern.permute.xlu0 31
        %782 = vperm.xlu0 %781, %v234
        %v783 = vpop.permute.xlu0 %782
        %v785 = vlaneseq
        %v786 = vshrl.u32 %v785, 7
        %v787 = vsub.s32 0, %v786
        %v788 = vrot.slane %v776, %v787
        %v789 = vmul.f32 %v779, %v788
        %v790 = vmul.f32 %v783, %v788
        %v791 = vadd.f32 %v774, %v789
        %v792 = vadd.f32 %v775, %v790
        %v793 = vld [vmem:[%s213 + $0x20] sm:$0x1]
        %794 = vset.pattern.permute.xlu0 32
        %795 = vperm.xlu0 %794, %v233
        %v796 = vpop.permute.xlu0 %795
        %798 = vset.pattern.permute.xlu0 32
        %799 = vperm.xlu0 %798, %v234
        %v800 = vpop.permute.xlu0 %799
        %v802 = vlaneseq
        %v803 = vshrl.u32 %v802, 7
        %v804 = vsub.s32 0, %v803
        %v805 = vrot.slane %v793, %v804
        %v806 = vmul.f32 %v796, %v805
        %v807 = vmul.f32 %v800, %v805
        %v808 = vadd.f32 %v791, %v806
        %v809 = vadd.f32 %v792, %v807
        %v810 = vld [vmem:[%s213 + $0x21] sm:$0x1]
        %811 = vset.pattern.permute.xlu0 33
        %812 = vperm.xlu0 %811, %v233
        %v813 = vpop.permute.xlu0 %812
        %815 = vset.pattern.permute.xlu0 33
        %816 = vperm.xlu0 %815, %v234
        %v817 = vpop.permute.xlu0 %816
        %v819 = vlaneseq
        %v820 = vshrl.u32 %v819, 7
        %v821 = vsub.s32 0, %v820
        %v822 = vrot.slane %v810, %v821
        %v823 = vmul.f32 %v813, %v822
        %v824 = vmul.f32 %v817, %v822
        %v825 = vadd.f32 %v808, %v823
        %v826 = vadd.f32 %v809, %v824
        %v827 = vld [vmem:[%s213 + $0x22] sm:$0x1]
        %828 = vset.pattern.permute.xlu0 34
        %829 = vperm.xlu0 %828, %v233
        %v830 = vpop.permute.xlu0 %829
        %832 = vset.pattern.permute.xlu0 34
        %833 = vperm.xlu0 %832, %v234
        %v834 = vpop.permute.xlu0 %833
        %v836 = vlaneseq
        %v837 = vshrl.u32 %v836, 7
        %v838 = vsub.s32 0, %v837
        %v839 = vrot.slane %v827, %v838
        %v840 = vmul.f32 %v830, %v839
        %v841 = vmul.f32 %v834, %v839
        %v842 = vadd.f32 %v825, %v840
        %v843 = vadd.f32 %v826, %v841
        %v844 = vld [vmem:[%s213 + $0x23] sm:$0x1]
        %845 = vset.pattern.permute.xlu0 35
        %846 = vperm.xlu0 %845, %v233
        %v847 = vpop.permute.xlu0 %846
        %849 = vset.pattern.permute.xlu0 35
        %850 = vperm.xlu0 %849, %v234
        %v851 = vpop.permute.xlu0 %850
        %v853 = vlaneseq
        %v854 = vshrl.u32 %v853, 7
        %v855 = vsub.s32 0, %v854
        %v856 = vrot.slane %v844, %v855
        %v857 = vmul.f32 %v847, %v856
        %v858 = vmul.f32 %v851, %v856
        %v859 = vadd.f32 %v842, %v857
        %v860 = vadd.f32 %v843, %v858
        %861 = vst [vmem:[%s232] sm:$0xff] %v859
        %862 = vst [vmem:[%s232 + $0x8] sm:$0xff] %v860
        %s863 = sand.u32 %s106, 1
        %s864 = sand.u32 %s106, 1
        %s865 = smul.addr %s864, 16
        %s866 = scalar_lea.vmem [#allocation3], %s865
        // Predicated region
        $region71: #{head_forward.1} parent=65 // pred_check
          %p867 = pneg %p116
        $region72: #{head_forward.1} parent=65 // pred_check_branch
          %869 = sbr.rel (%p867) target = $region74
        $region73: #{head_forward.1} parent=65 // pred_region
          %s870 = smul.addr %s18, 4
          %s871 = sadd.s32 %s19, %s870
          %s872 = smul.addr %s871, 8
          %s873 = scalar_lea.vmem %s3, %s872
          // Predicated region
          $region75: #{head_forward.1} parent=73 // pred_check
            _
          $region76: #{head_forward.1} parent=73 // pred_check_branch
            %875 = sbr.rel (0) target = $region78
          $region77: #{head_forward.1} parent=73 // pred_region
            // Predicated region
            $region79: #{head_forward.1} parent=77 // pred_check
              _
            $region80: #{head_forward.1} parent=77 // pred_check_branch
              %877 = sbr.rel (0) target = $region82
            $region81: #{head_forward.1} parent=77 // pred_region
              // Predicated region
              $region94: #{head_forward.1} parent=81 // pred_check
                _
              $region95: #{head_forward.1} parent=81 // pred_check_branch
                %894 = sbr.rel (0) target = $region97
              $region96: #{head_forward.1} parent=81 // pred_region
                loop: start=0, step=1, limit=1
                $region98: #{head_forward.1} parent=96 // loop_pre_header
                  _
                $region99: #{head_forward.1} parent=96 // loop_header
                  %s896 = sphi 0, %s900
                  %p897 = scmp.ge.s32.totalorder %s896, 1
                  %s901 = sphi %s866, %s866
                  %s902 = sphi %s873, %s873
                $region100: #{head_forward.1} parent=96 // loop_header_branch
                  %899 = sbr.rel (%p897) target = $region104
                $region101: #{head_forward.1} parent=96 // loop_body
                  %v903 = vld [vmem:[%s901] sm:$0xff]
                  %904 = vst [vmem:[%s902] sm:$0xff] %v903
                  %v905 = vld [vmem:[%s901 + $0x8] sm:$0xff]
                  %906 = vst [vmem:[%s902 + $0x10] sm:$0xff] %v905
                $region102: #{head_forward.1} parent=96 // loop_footer
                  %s900 = sadd.s32 1, %s896
                $region103: #{head_forward.1} parent=96 // loop_footer_branch
                  %895 = sbr.rel target = $region99
                $region104: #{head_forward.1} parent=96 // loop_exit
                  _
              $region97: #{head_forward.1} parent=81 // pred_fallthru
                _
              // Predicated region
              $region105: #{head_forward.1} parent=81 // pred_check
                _
              $region106: #{head_forward.1} parent=81 // pred_check_branch
                %908 = sbr.rel target = $region108
              $region107: #{head_forward.1} parent=81 // pred_region
                _
              $region108: #{head_forward.1} parent=81 // pred_fallthru
                _
            $region82: #{head_forward.1} parent=77 // pred_fallthru
              _
            // Predicated region
            $region83: #{head_forward.1} parent=77 // pred_check
              _
            $region84: #{head_forward.1} parent=77 // pred_check_branch
              %879 = sbr.rel target = $region86
            $region85: #{head_forward.1} parent=77 // pred_region
              loop: start=0, step=1, limit=1
              $region87: #{head_forward.1} parent=85 // loop_pre_header
                _
              $region88: #{head_forward.1} parent=85 // loop_header
                %s882 = sphi 0, %s886
                %p883 = scmp.ge.s32.totalorder %s882, 1
                %s887 = sphi %s866, %s866
                %s888 = sphi %s873, %s873
              $region89: #{head_forward.1} parent=85 // loop_header_branch
                %885 = sbr.rel (%p883) target = $region93
              $region90: #{head_forward.1} parent=85 // loop_body
                %v889 = vld [vmem:[%s887] sm:$0xff]
                %890 = vst [vmem:[%s888] sm:$0xff] %v889
                %v891 = vld [vmem:[%s887 + $0x8] sm:$0xff]
                %892 = vst [vmem:[%s888 + $0x10] sm:$0xff] %v891
              $region91: #{head_forward.1} parent=85 // loop_footer
                %s886 = sadd.s32 1, %s882
              $region92: #{head_forward.1} parent=85 // loop_footer_branch
                %881 = sbr.rel target = $region88
              $region93: #{head_forward.1} parent=85 // loop_exit
                _
            $region86: #{head_forward.1} parent=77 // pred_fallthru
              _
          $region78: #{head_forward.1} parent=73 // pred_fallthru
            _
          %909 = vnop
        $region74: #{head_forward.1} parent=65 // pred_fallthru
          _
      $region66: #{head_forward.1} parent=5 // pred_fallthru
        _
      %p910 = scmp.le.s32.totalorder 2, %s9
      // Predicated region
      $region109: #{head_forward.1} parent=5 // pred_check
        %p911 = pneg %p910
      $region110: #{head_forward.1} parent=5 // pred_check_branch
        %913 = sbr.rel (%p911) target = $region112
      $region111: #{head_forward.1} parent=5 // pred_region
        %s914 = ssub.s32 %s9, 2
        // Predicated region
        $region113: #{head_forward.1} parent=111 // pred_check
          %p915 = pneg %p122
        $region114: #{head_forward.1} parent=111 // pred_check_branch
          %917 = sbr.rel (%p915) target = $region116
        $region115: #{head_forward.1} parent=111 // pred_region
          %s918 = sand.u32 %s107, 1
          %s919 = sand.u32 %s107, 1
          %s920 = smul.addr %s919, 16
          %s921 = scalar_lea.vmem [#allocation3], %s920
        $region116: #{head_forward.1} parent=111 // pred_fallthru
          _
      $region112: #{head_forward.1} parent=5 // pred_fallthru
        _
    $region6: #{head_forward.1} parent=1 // loop_footer
      %s13 = sadd.s32 1, %s9
    $region7: #{head_forward.1} parent=1 // loop_footer_branch
      %8 = sbr.rel target = $region3
    $region8: #{head_forward.1} parent=1 // loop_exit
      _

</llo_original>
